<compile_context>
chip_gen: v5e
topology: v5e:2x2
jax: 0.10.0
libtpu: 0.0.40
codegen_flags: <defaults>
</compile_context>

<pallas_src>
import functools

import jax
import jax.numpy as jnp
from jax.experimental import pallas as pl
from jax.experimental.pallas import tpu as pltpu

BN_EPS = 1e-5
LANE = 128
SUBLANE = 8
_MiB = 1 << 20
_SMALL_BATCH_MAX = 512   # above this, switch to the batch-tiled grid path
_TM = 256                # batch tile for the tiled path (>=256: v6e/v7x MXU native)


def _round_up(n, m):
    return ((n + m - 1) // m) * m


def _full_spec(shape):
    # Whole-array block (block == full array dims -> exempt from (8,128) rule).
    return pl.BlockSpec(shape, lambda: (0,) * len(shape))


def _make_fused_kernel(num_hidden, in_features, out_rows, out_cols):
    """Kernel over refs (x, w_stack, b_stack, out).

    x_ref: (M, in_features)         activations (may be logical, unpadded)
    w_ref: (L+1, F, F)              BN-folded, zero-padded weights
    b_ref: (L+1, 1, F)              BN-folded biases (f32)
    o_ref: (out_rows, out_cols)     output (may be logical, unpadded)
    """
    def kernel(x_ref, w_ref, b_ref, o_ref):
        feat = w_ref.shape[-1]
        h = x_ref[...]
        k = in_features                       # valid rows of the current slab
        for l in range(num_hidden):
            w = w_ref[l]
            if k != feat:
                w = w[:k, :]                  # static slice (first layer only)
            y = jnp.dot(h.astype(w_ref.dtype), w,
                        preferred_element_type=jnp.float32)
            h = jnp.maximum(y + b_ref[l], 0.0)   # epilogue stays f32
            k = feat
        # Dropout: identity in eval mode.  Final linear:
        wf = w_ref[num_hidden]
        if k != feat:
            wf = wf[:k, :]
        y = jnp.dot(h.astype(w_ref.dtype), wf,
                    preferred_element_type=jnp.float32) + b_ref[num_hidden]
        if (out_rows, out_cols) != (y.shape[0], y.shape[1]):
            y = y[:out_rows, :out_cols]
        o_ref[...] = y.astype(o_ref.dtype)

    return kernel


def _vmem_limit(operand_bytes):
    return int(min(64 * _MiB, max(32 * _MiB, 4 * operand_bytes)))


def _cost(batch_rows, w_stack, b_stack, out_bytes, x_bytes):
    feat = w_stack.shape[-1]
    flops = 2 * int(batch_rows) * feat * feat * int(w_stack.shape[0])
    bytes_accessed = int(x_bytes + w_stack.size * w_stack.dtype.itemsize
                         + b_stack.size * b_stack.dtype.itemsize + out_bytes)
    return pl.CostEstimate(flops=flops, transcendentals=0,
                           bytes_accessed=bytes_accessed), bytes_accessed


def _mlp_small(x, w_stack, b_stack, output_size):
    """Single grid point; logical-shape input and output (no wrapper pad/slice)."""
    B, Fin = x.shape
    num_hidden = w_stack.shape[0] - 1
    out_bytes = B * output_size * 4
    cost, operand_bytes = _cost(B, w_stack, b_stack, out_bytes,
                                x.size * x.dtype.itemsize)
    return pl.pallas_call(
        _make_fused_kernel(num_hidden, Fin, B, output_size),
        out_shape=jax.ShapeDtypeStruct((B, output_size), jnp.float32),
        grid=(),
        in_specs=[_full_spec(x.shape),
                  _full_spec(w_stack.shape),
                  _full_spec(b_stack.shape)],
        out_specs=_full_spec((B, output_size)),
        compiler_params=pltpu.CompilerParams(
            vmem_limit_bytes=_vmem_limit(operand_bytes)),
        cost_estimate=cost,
    )(x, w_stack, b_stack)


def _mlp_tiled(x, w_stack, b_stack, output_size, tm=_TM):
    """Batch-tiled path for large M: parallel grid axis (megacore on v7x),
    weight stack stays VMEM-resident across tiles."""
    B, Fin = x.shape
    feat = w_stack.shape[-1]
    num_hidden = w_stack.shape[0] - 1
    b_pad = _round_up(B, tm)
    if b_pad != B or Fin != feat:
        x = jnp.pad(x, ((0, b_pad - B), (0, feat - Fin)))
    out_bytes = b_pad * feat * 4
    cost, operand_bytes = _cost(b_pad, w_stack, b_stack, out_bytes,
                                x.size * x.dtype.itemsize)
    out = pl.pallas_call(
        _make_fused_kernel(num_hidden, feat, tm, feat),
        out_shape=jax.ShapeDtypeStruct((b_pad, feat), jnp.float32),
        grid=(b_pad // tm,),
        in_specs=[pl.BlockSpec((tm, feat), lambda i: (i, 0)),
                  pl.BlockSpec(w_stack.shape, lambda i: (0, 0, 0)),
                  pl.BlockSpec(b_stack.shape, lambda i: (0, 0, 0))],
        out_specs=pl.BlockSpec((tm, feat), lambda i: (i, 0)),
        compiler_params=pltpu.CompilerParams(
            dimension_semantics=("parallel",),
            vmem_limit_bytes=_vmem_limit(operand_bytes)),
        cost_estimate=cost,
    )(x, w_stack, b_stack)
    return out[:B, :output_size]


@functools.partial(jax.jit, static_argnames=("output_size",))
def forward(x, w_stack, b_stack, output_size):
    if x.shape[0] <= _SMALL_BATCH_MAX:
        return _mlp_small(x, w_stack, b_stack, output_size)
    return _mlp_tiled(x, w_stack, b_stack, output_size)


# ----------------------------------------------------------------------------
# Parameter construction (mirrors PyTorch module shapes) + BN folding/packing.
# ----------------------------------------------------------------------------
def init_params(key, input_size, output_size, layers):
    """Raw params with PyTorch-shaped tensors (w: [out, in])."""
    hidden = []
    prev = input_size
    for size in layers:
        key, kw, kb, kg, kbeta, km, kv = jax.random.split(key, 7)
        bound = 1.0 / jnp.sqrt(prev)
        hidden.append(dict(
            w=jax.random.uniform(kw, (size, prev), jnp.float32, -bound, bound),
            b=jax.random.uniform(kb, (size,), jnp.float32, -bound, bound),
            gamma=jax.random.uniform(kg, (size,), jnp.float32, 0.5, 1.5),
            beta=jax.random.uniform(kbeta, (size,), jnp.float32, -0.5, 0.5),
            mean=jax.random.uniform(km, (size,), jnp.float32, -0.1, 0.1),
            var=jax.random.uniform(kv, (size,), jnp.float32, 0.8, 1.2),
        ))
        prev = size
    key, kw, kb = jax.random.split(key, 3)
    bound = 1.0 / jnp.sqrt(prev)
    final = dict(
        w=jax.random.uniform(kw, (output_size, prev), jnp.float32, -bound, bound),
        b=jax.random.uniform(kb, (output_size,), jnp.float32, -bound, bound),
    )
    return hidden, final


def fold_and_pad(hidden_raw, final_raw, input_size, param_dtype=jnp.float32):
    """Fold BN into (W, b) in f32, zero-pad every feature dim to the max padded
    width F (multiple of 128), and stack into (L+1, F, F) / (L+1, 1, F).

    param_dtype=jnp.bfloat16 is the recommended setting on v6e/v7x (halves
    weight DMA bytes); biases stay f32 for the epilogue.
    """
    dims = ([input_size] + [p["w"].shape[0] for p in hidden_raw]
            + [final_raw["w"].shape[0]])
    feat = max(_round_up(d, LANE) for d in dims)
    num_layers = len(hidden_raw) + 1
    w_stack = jnp.zeros((num_layers, feat, feat), param_dtype)
    b_stack = jnp.zeros((num_layers, 1, feat), jnp.float32)
    prev = input_size
    for l, p in enumerate(hidden_raw):
        out_f = p["w"].shape[0]
        scale = p["gamma"] * jax.lax.rsqrt(p["var"] + BN_EPS)        # f32 fold
        w_fold = (p["w"].T * scale[None, :]).astype(param_dtype)     # [in, out]
        b_fold = (p["b"] - p["mean"]) * scale + p["beta"]            # [out]
        w_stack = w_stack.at[l, :prev, :out_f].set(w_fold)
        b_stack = b_stack.at[l, 0, :out_f].set(b_fold)
        prev = out_f
    out_f = final_raw["w"].shape[0]
    w_stack = w_stack.at[num_layers - 1, :prev, :out_f].set(
        final_raw["w"].T.astype(param_dtype))
    b_stack = b_stack.at[num_layers - 1, 0, :out_f].set(final_raw["b"])
    return w_stack, b_stack


def reference_forward(x, hidden_raw, final_raw):
    """Unfused, unfolded pure-JAX reference (eval-mode PyTorch semantics)."""
    h = x
    for p in hidden_raw:
        y = h @ p["w"].T + p["b"]
        y = (y - p["mean"]) * jax.lax.rsqrt(p["var"] + BN_EPS) * p["gamma"] + p["beta"]
        h = jnp.maximum(y, 0.0)
    return h @ final_raw["w"].T + final_raw["b"]


if __name__ == "__main__":
    input_size = 32
    output_size = 16
    layers = [64, 128]
    batch = 8

    key = jax.random.PRNGKey(0)
    key, kx = jax.random.split(key)
    x = jax.random.normal(kx, (batch, input_size), jnp.float32)

    hidden_raw, final_raw = init_params(key, input_size, output_size, layers)
    w_stack, b_stack = fold_and_pad(hidden_raw, final_raw, input_size)

    out = forward(x, w_stack, b_stack, output_size)
    out = jax.block_until_ready(out)

    ref = reference_forward(x, hidden_raw, final_raw)
    assert out.shape == (batch, output_size)
    assert jnp.allclose(out, ref, atol=1e-4, rtol=1e-4), \
        float(jnp.max(jnp.abs(out - ref)))

    print("KERNEL_OK")
</pallas_src>

<mosaic_0001>
module attributes {stable_mosaic.version = 11 : i64} {
  func.func @kernel(%arg0: memref<8x32xf32, #tpu.memory_space<vmem>>, %arg1: memref<3x128x128xf32, #tpu.memory_space<vmem>>, %arg2: memref<3x1x128xf32, #tpu.memory_space<vmem>>, %arg3: memref<8x16xf32, #tpu.memory_space<vmem>>) attributes {dimension_semantics = [], scalar_prefetch = 0 : i64, scratch_operands = 0 : i64, tpu.core_type = #tpu.core_type<tc>} {
    %c0 = arith.constant 0 : index
    %c0_0 = arith.constant 0 : index
    %0 = vector.load %arg0[%c0, %c0_0] : memref<8x32xf32, #tpu.memory_space<vmem>>, vector<8x32xf32>
    %c0_1 = arith.constant 0 : index
    %c0_2 = arith.constant 0 : index
    %c0_3 = arith.constant 0 : index
    %1 = vector.load %arg1[%c0_1, %c0_2, %c0_3] : memref<3x128x128xf32, #tpu.memory_space<vmem>>, vector<1x128x128xf32>
    %2 = vector.shape_cast %1 : vector<1x128x128xf32> to vector<128x128xf32>
    %3 = vector.extract_strided_slice %2 {offsets = [0, 0], sizes = [32, 128], strides = [1, 1]} : vector<128x128xf32> to vector<32x128xf32>
    %cst = arith.constant dense<0.000000e+00> : vector<8x128xf32>
    %4 = tpu.matmul %0, %3, %cst {dimension_numbers = #tpu.dot_dimension_numbers<[1], [0], [0], [1], [0, 0, 1, 1], [], []>} : vector<8x32xf32>, vector<32x128xf32>, vector<8x128xf32> -> vector<8x128xf32>
    %c0_4 = arith.constant 0 : index
    %c0_5 = arith.constant 0 : index
    %c0_6 = arith.constant 0 : index
    %5 = vector.load %arg2[%c0_4, %c0_5, %c0_6] : memref<3x1x128xf32, #tpu.memory_space<vmem>>, vector<1x1x128xf32>
    %6 = vector.shape_cast %5 : vector<1x1x128xf32> to vector<1x128xf32>
    %7 = vector.broadcast %6 : vector<1x128xf32> to vector<8x128xf32>
    %8 = arith.addf %4, %7 : vector<8x128xf32>
    %cst_7 = arith.constant 0.000000e+00 : f32
    %9 = vector.broadcast %cst_7 : f32 to vector<8x128xf32>
    %10 = arith.maximumf %8, %9 : vector<8x128xf32>
    %c1 = arith.constant 1 : index
    %c0_8 = arith.constant 0 : index
    %c0_9 = arith.constant 0 : index
    %11 = vector.load %arg1[%c1, %c0_8, %c0_9] : memref<3x128x128xf32, #tpu.memory_space<vmem>>, vector<1x128x128xf32>
    %12 = vector.shape_cast %11 : vector<1x128x128xf32> to vector<128x128xf32>
    %cst_10 = arith.constant dense<0.000000e+00> : vector<8x128xf32>
    %13 = tpu.matmul %10, %12, %cst_10 {dimension_numbers = #tpu.dot_dimension_numbers<[1], [0], [0], [1], [0, 0, 1, 1], [], []>} : vector<8x128xf32>, vector<128x128xf32>, vector<8x128xf32> -> vector<8x128xf32>
    %c1_11 = arith.constant 1 : index
    %c0_12 = arith.constant 0 : index
    %c0_13 = arith.constant 0 : index
    %14 = vector.load %arg2[%c1_11, %c0_12, %c0_13] : memref<3x1x128xf32, #tpu.memory_space<vmem>>, vector<1x1x128xf32>
    %15 = vector.shape_cast %14 : vector<1x1x128xf32> to vector<1x128xf32>
    %16 = vector.broadcast %15 : vector<1x128xf32> to vector<8x128xf32>
    %17 = arith.addf %13, %16 : vector<8x128xf32>
    %cst_14 = arith.constant 0.000000e+00 : f32
    %18 = vector.broadcast %cst_14 : f32 to vector<8x128xf32>
    %19 = arith.maximumf %17, %18 : vector<8x128xf32>
    %c2 = arith.constant 2 : index
    %c0_15 = arith.constant 0 : index
    %c0_16 = arith.constant 0 : index
    %20 = vector.load %arg1[%c2, %c0_15, %c0_16] : memref<3x128x128xf32, #tpu.memory_space<vmem>>, vector<1x128x128xf32>
    %21 = vector.shape_cast %20 : vector<1x128x128xf32> to vector<128x128xf32>
    %cst_17 = arith.constant dense<0.000000e+00> : vector<8x128xf32>
    %22 = tpu.matmul %19, %21, %cst_17 {dimension_numbers = #tpu.dot_dimension_numbers<[1], [0], [0], [1], [0, 0, 1, 1], [], []>} : vector<8x128xf32>, vector<128x128xf32>, vector<8x128xf32> -> vector<8x128xf32>
    %c2_18 = arith.constant 2 : index
    %c0_19 = arith.constant 0 : index
    %c0_20 = arith.constant 0 : index
    %23 = vector.load %arg2[%c2_18, %c0_19, %c0_20] : memref<3x1x128xf32, #tpu.memory_space<vmem>>, vector<1x1x128xf32>
    %24 = vector.shape_cast %23 : vector<1x1x128xf32> to vector<1x128xf32>
    %25 = vector.broadcast %24 : vector<1x128xf32> to vector<8x128xf32>
    %26 = arith.addf %22, %25 : vector<8x128xf32>
    %27 = vector.extract_strided_slice %26 {offsets = [0, 0], sizes = [8, 16], strides = [1, 1]} : vector<8x128xf32> to vector<8x16xf32>
    %c0_21 = arith.constant 0 : index
    %c0_22 = arith.constant 0 : index
    %28 = vector.load %arg3[%c0_21, %c0_22] : memref<8x16xf32, #tpu.memory_space<vmem>>, vector<8x16xf32>
    tpu.vector_store %arg3[%c0_21, %c0_22], %27 {strides = array<i32>} : memref<8x16xf32, #tpu.memory_space<vmem>>, vector<8x16xf32>,
    return
  }
}

</mosaic_0001>

<llo_original>
// kernel: forward.1
$region0: #{forward.1}
  #allocation0 [shape = 'u32[]', space=smem, size = 0x4, offset = 0x4, fixed_abs, tag = 'smem constant byte address 0x4 - core index']
  #allocation1 [shape = 'u32[72,128]{1,0:T(1,128)}', space=vmem, size = 0x9000, scoped, tag = 'internal scratch']
  %s0 = inlined_call_operand.hbm [shape: f32[8,32], index: 0, kind: input, shape index: {}]
  %s1 = inlined_call_operand.hbm [shape: f32[3,128,128], index: 1, kind: input, shape index: {}]
  %s2 = inlined_call_operand.hbm [shape: f32[3,1,128], index: 2, kind: input, shape index: {}]
  %s3 = inlined_call_operand.hbm [shape: f32[8,16], index: 3, kind: output, shape index: {}]
  %s4 = sld [smem:[#allocation0]]
  $region34: #{forward.1} parent=0
    _
  %s6 = ssub.s32 1, %s4
  %s7 = scalar_select 0, %s6, %s4
  $region1: #{forward.1} parent=0
    #allocation2 [shape = 'u8[4096]{0}', space=vmem, size = 0x1000, scoped, tag = 'input window, operand 0, single buffered']
    #allocation3 [shape = 's32[1]{0}', space=sflag, size = 0x4, scoped, tag = 'scoped memory for forward.1']
    #allocation4 [shape = 's32[1]{0}', space=sflag, size = 0x4, scoped, tag = 'scoped memory for forward.1']
    #allocation5 [shape = 'u8[196608]{0}', space=vmem, size = 0x30000, scoped, tag = 'input window, operand 1, single buffered']
    #allocation6 [shape = 's32[1]{0}', space=sflag, size = 0x4, scoped, tag = 'scoped memory for forward.1']
    #allocation7 [shape = 'u8[1536]{0}', space=vmem, size = 0x800, scoped, tag = 'input window, operand 2, single buffered']
    #allocation8 [shape = 'u8[4096]{0}', space=vmem, size = 0x1000, scoped, tag = 'output window, operand 0, single buffered']
    %8 = vsyncpa [#allocation3], 0
    %9 = vsyncpa [#allocation6], 0
    %10 = vsyncpa [#allocation4], 0
    // Predicated region
    $region2: #{forward.1} parent=1 // pred_check
      _
    $region3: #{forward.1} parent=1 // pred_check_branch
      %12 = sbr.rel (0) target = $region5
    $region4: #{forward.1} parent=1 // pred_region
      %14 = vsyncadd [#allocation3], 0
      %s16 = sshll.u32 %s0, 4
      %s17 = int_to_ptr.hbm [resolvable:$true] %s16
      %s18 = sshll.u32 [#allocation2], 4
      %s19 = int_to_ptr.vmem [resolvable:$true] %s18
      %21 = dma.hbm_to_vmem [thread:$0]  %s17, 128, %s19, [#allocation3]
    $region5: #{forward.1} parent=1 // pred_fallthru
      _
    // Predicated region
    $region6: #{forward.1} parent=1 // pred_check
      _
    $region7: #{forward.1} parent=1 // pred_check_branch
      %23 = sbr.rel (0) target = $region9
    $region8: #{forward.1} parent=1 // pred_region
      %25 = vsyncadd [#allocation6], 0
      %s26 = sshll.u32 %s1, 4
      %s27 = int_to_ptr.hbm [resolvable:$true] %s26
      %s28 = sshll.u32 [#allocation5], 4
      %s29 = int_to_ptr.vmem [resolvable:$true] %s28
      %34 = dma.hbm_to_vmem [thread:$0]  %s27, 6144, %s29, [#allocation6], 128, 128, 8
    $region9: #{forward.1} parent=1 // pred_fallthru
      _
    // Predicated region
    $region10: #{forward.1} parent=1 // pred_check
      _
    $region11: #{forward.1} parent=1 // pred_check_branch
      %36 = sbr.rel (0) target = $region13
    $region12: #{forward.1} parent=1 // pred_region
      %38 = vsyncadd [#allocation6], 0
      %s39 = sshll.u32 %s2, 4
      %s40 = int_to_ptr.hbm [resolvable:$true] %s39
      %s41 = sshll.u32 [#allocation7], 4
      %s42 = int_to_ptr.vmem [resolvable:$true] %s41
      %47 = dma.hbm_to_vmem [thread:$0]  %s40, 48, %s42, [#allocation6], 16, 16, 1
    $region13: #{forward.1} parent=1 // pred_fallthru
      _
    // Predicated region
    $region14: #{forward.1} parent=1 // pred_check
      _
    $region15: #{forward.1} parent=1 // pred_check_branch
      %49 = sbr.rel (0) target = $region17
    $region16: #{forward.1} parent=1 // pred_region
      %51 = dma.done [#allocation3], 128
    $region17: #{forward.1} parent=1 // pred_fallthru
      _
    // Predicated region
    $region18: #{forward.1} parent=1 // pred_check
      _
    $region19: #{forward.1} parent=1 // pred_check_branch
      %53 = sbr.rel (0) target = $region21
    $region20: #{forward.1} parent=1 // pred_region
      %55 = dma.done [#allocation6], 6144
    $region21: #{forward.1} parent=1 // pred_fallthru
      _
    // Predicated region
    $region22: #{forward.1} parent=1 // pred_check
      _
    $region23: #{forward.1} parent=1 // pred_check_branch
      %57 = sbr.rel (0) target = $region25
    $region24: #{forward.1} parent=1 // pred_region
      %59 = dma.done [#allocation6], 48
    $region25: #{forward.1} parent=1 // pred_fallthru
      _
    %v60 = vld [vmem:[#allocation2] sm:$0xff]
    %v61 = vld [vmem:[#allocation5] sm:$0xff]
    %v62 = vld [vmem:[#allocation5 + $0x8] sm:$0xff]
    %v63 = vld [vmem:[#allocation5 + $0x10] sm:$0xff]
    %v64 = vld [vmem:[#allocation5 + $0x18] sm:$0xff]
    %v65 = vld [vmem:[#allocation7] sm:$0x1]
    %v67 = vperm.slane %v65, 0
    %vm69 = vcmask 261120
    %v71 = vsel %vm69, %v60, 0
    %73 = vmatpush.msra.mxu0 0.0
    %74 = vmatpush.msra.mxu0 0.0
    %75 = vmatpush.msra.mxu0 0.0
    %76 = vmatpush.msra.mxu0 0.0
    %77 = vmatpush.msra.mxu0 0.0
    %78 = vmatpush.msra.mxu0 0.0
    %79 = vmatpush.msra.mxu0 0.0
    %80 = vmatpush.msra.mxu0 0.0
    %81 = vmatpush.msra.mxu0 0.0
    %82 = vmatpush.msra.mxu0 0.0
    %83 = vmatpush.msra.mxu0 0.0
    %84 = vmatpush.msra.mxu0 0.0
    %85 = vmatpush.msra.mxu0 %v64
    %86 = vmatpush.msra.mxu0 %v63
    %87 = vmatpush.msra.mxu0 %v62
    %88 = vmatpush.msra.mxu0 %v61
    %89 = vmatmul.f32.gmra.mxu0 %v71
    %v90 = vpop.f32.mrf.mxu0
    %v91 = vadd.f32 %v67, %v90
    %92 = vdwg.mxu0
    %v93 = vmax.f32 %v91, 0.0
    %s94 = scalar_lea.vmem [#allocation5], 128
    %v95 = vld [vmem:[%s94] sm:$0xff]
    %v96 = vld [vmem:[%s94 + $0x8] sm:$0xff]
    %v97 = vld [vmem:[%s94 + $0x10] sm:$0xff]
    %v98 = vld [vmem:[%s94 + $0x18] sm:$0xff]
    %v99 = vld [vmem:[%s94 + $0x20] sm:$0xff]
    %v100 = vld [vmem:[%s94 + $0x28] sm:$0xff]
    %v101 = vld [vmem:[%s94 + $0x30] sm:$0xff]
    %v102 = vld [vmem:[%s94 + $0x38] sm:$0xff]
    %v103 = vld [vmem:[%s94 + $0x40] sm:$0xff]
    %v104 = vld [vmem:[%s94 + $0x48] sm:$0xff]
    %v105 = vld [vmem:[%s94 + $0x50] sm:$0xff]
    %v106 = vld [vmem:[%s94 + $0x58] sm:$0xff]
    %v107 = vld [vmem:[%s94 + $0x60] sm:$0xff]
    %v108 = vld [vmem:[%s94 + $0x68] sm:$0xff]
    %v109 = vld [vmem:[%s94 + $0x70] sm:$0xff]
    %v110 = vld [vmem:[%s94 + $0x78] sm:$0xff]
    %s111 = scalar_lea.vmem [#allocation7], 1
    %v112 = vld [vmem:[%s111] sm:$0x1]
    %v114 = vperm.slane %v112, 0
    %116 = vmatpush.msra.mxu0 %v110
    %117 = vmatpush.msra.mxu0 %v109
    %118 = vmatpush.msra.mxu0 %v108
    %119 = vmatpush.msra.mxu0 %v107
    %120 = vmatpush.msra.mxu0 %v106
    %121 = vmatpush.msra.mxu0 %v105
    %122 = vmatpush.msra.mxu0 %v104
    %123 = vmatpush.msra.mxu0 %v103
    %124 = vmatpush.msra.mxu0 %v102
    %125 = vmatpush.msra.mxu0 %v101
    %126 = vmatpush.msra.mxu0 %v100
    %127 = vmatpush.msra.mxu0 %v99
    %128 = vmatpush.msra.mxu0 %v98
    %129 = vmatpush.msra.mxu0 %v97
    %130 = vmatpush.msra.mxu0 %v96
    %131 = vmatpush.msra.mxu0 %v95
    %132 = vmatmul.f32.gmra.mxu0 %v93
    %v133 = vpop.f32.mrf.mxu0
    %v134 = vadd.f32 %v114, %v133
    %135 = vdwg.mxu0
    %v136 = vmax.f32 %v134, 0.0
    %s137 = scalar_lea.vmem [#allocation5], 256
    %v138 = vld [vmem:[%s137] sm:$0xff]
    %v139 = vld [vmem:[%s137 + $0x8] sm:$0xff]
    %v140 = vld [vmem:[%s137 + $0x10] sm:$0xff]
    %v141 = vld [vmem:[%s137 + $0x18] sm:$0xff]
    %v142 = vld [vmem:[%s137 + $0x20] sm:$0xff]
    %v143 = vld [vmem:[%s137 + $0x28] sm:$0xff]
    %v144 = vld [vmem:[%s137 + $0x30] sm:$0xff]
    %v145 = vld [vmem:[%s137 + $0x38] sm:$0xff]
    %v146 = vld [vmem:[%s137 + $0x40] sm:$0xff]
    %v147 = vld [vmem:[%s137 + $0x48] sm:$0xff]
    %v148 = vld [vmem:[%s137 + $0x50] sm:$0xff]
    %v149 = vld [vmem:[%s137 + $0x58] sm:$0xff]
    %v150 = vld [vmem:[%s137 + $0x60] sm:$0xff]
    %v151 = vld [vmem:[%s137 + $0x68] sm:$0xff]
    %v152 = vld [vmem:[%s137 + $0x70] sm:$0xff]
    %v153 = vld [vmem:[%s137 + $0x78] sm:$0xff]
    %s154 = scalar_lea.vmem [#allocation7], 2
    %v155 = vld [vmem:[%s154] sm:$0x1]
    %v157 = vperm.slane %v155, 0
    %159 = vmatpush.msra.mxu0 %v153
    %160 = vmatpush.msra.mxu0 %v152
    %161 = vmatpush.msra.mxu0 %v151
    %162 = vmatpush.msra.mxu0 %v150
    %163 = vmatpush.msra.mxu0 %v149
    %164 = vmatpush.msra.mxu0 %v148
    %165 = vmatpush.msra.mxu0 %v147
    %166 = vmatpush.msra.mxu0 %v146
    %167 = vmatpush.msra.mxu0 %v145
    %168 = vmatpush.msra.mxu0 %v144
    %169 = vmatpush.msra.mxu0 %v143
    %170 = vmatpush.msra.mxu0 %v142
    %171 = vmatpush.msra.mxu0 %v141
    %172 = vmatpush.msra.mxu0 %v140
    %173 = vmatpush.msra.mxu0 %v139
    %174 = vmatpush.msra.mxu0 %v138
    %175 = vmatmul.f32.gmra.mxu0 %v136
    %v176 = vpop.f32.mrf.mxu0
    %v177 = vadd.f32 %v157, %v176
    %178 = vdwg.mxu0
    %vm179 = vcmask 130048
    %180 = vst.msk [vmem:[#allocation8] sm:$0xff] %vm179, %v177
    // Predicated region
    $region26: #{forward.1} parent=1 // pred_check
      _
    $region27: #{forward.1} parent=1 // pred_check_branch
      %182 = sbr.rel (0) target = $region29
    $region28: #{forward.1} parent=1 // pred_region
      %184 = vsyncadd [#allocation4], 0
      %s186 = sshll.u32 [#allocation8], 4
      %s187 = int_to_ptr.vmem [resolvable:$true] %s186
      %s188 = sshll.u32 %s3, 4
      %s189 = int_to_ptr.hbm [resolvable:$true] %s188
      %191 = dma.vmem_to_hbm [thread:$0]  %s187, 128, %s189, [#allocation4]
    $region29: #{forward.1} parent=1 // pred_fallthru
      _
    // Predicated region
    $region30: #{forward.1} parent=1 // pred_check
      _
    $region31: #{forward.1} parent=1 // pred_check_branch
      %193 = sbr.rel (0) target = $region33
    $region32: #{forward.1} parent=1 // pred_region
      %195 = dma.done [#allocation4], 128
    $region33: #{forward.1} parent=1 // pred_fallthru
      _
    %196 = vsyncpa [#allocation3], 1
    %197 = vsyncpa [#allocation6], 1
    %198 = vsyncpa [#allocation4], 1

</llo_original>
